<compile_context>
chip_gen: v7x
topology: tpu7x:2x2x1
jax: 0.10.0
libtpu: 0.0.40
codegen_flags: <defaults>
</compile_context>

<pallas_src>
import jax
import jax.numpy as jnp
from jax.experimental import pallas as pl
from jax.experimental.pallas import tpu as pltpu  # noqa: F401  (kept for parity / future tiling)


# ----------------------------------------------------------------------------
# Fused kernel: single constant-folded matmul  [emb | heads | pad]
# ----------------------------------------------------------------------------
def prima_kernel(x_ref, w_ref, b_ref, out_ref):
    # x_ref : (B, K)  bf16   pooled patch features (mean over patches folded in wrapper)
    # w_ref : (K, N)  bf16   pw @ [projw | projw @ hw_sel | 0-pad]      (N = 256)
    # b_ref : (1, N)  f32    pb @ W + [projb | projb@hw_sel + hb_sel - thresh | 0]
    # out   : (B, N)  f32    [clip_emb | head values (thresholds applied) | pad]
    out_ref[...] = (
        jnp.dot(x_ref[...], w_ref[...], preferred_element_type=jnp.float32)
        + b_ref[...]
    )


def run_prima_kernel(x_pooled, w, b):
    B = x_pooled.shape[0]
    N = w.shape[1]
    full = lambda arr: pl.BlockSpec(arr.shape, lambda: (0,) * arr.ndim)
    return pl.pallas_call(
        prima_kernel,
        out_shape=jax.ShapeDtypeStruct((B, N), jnp.float32),
        in_specs=[full(x_pooled), full(w), full(b)],
        out_specs=pl.BlockSpec((B, N), lambda: (0, 0)),
    )(x_pooled, w, b)


# ----------------------------------------------------------------------------
# Glue: NCHW -> patches, parameter construction, constant folding
# ----------------------------------------------------------------------------
def nchw_to_patches(x, patch):
    # x: (B, C, H, W) -> (B * num_patches, C * patch * patch), batch outermost.
    B, C, H, W = x.shape
    nh, nw = H // patch, W // patch
    x = x.reshape(B, C, nh, patch, nw, patch)
    x = jnp.transpose(x, (0, 2, 4, 1, 3, 5))            # (B, nh, nw, C, ph, pw)
    return x.reshape(B * nh * nw, C * patch * patch)


class PrimaModelWHeadsPallas:
    """Synthetic PRIMA model: linear patch encoder + fully constant-folded linear heads."""

    HEAD_OUT = 8  # per diagnosis / referral head output width (synthetic)
    PRIORITY_LEVELS = ["none", "low", "medium", "high"]
    LANE = 128

    def __init__(self, key, in_ch=4, img=16, patch=8, hidden=128, embed=128):
        self.patch = patch
        self.hidden = hidden
        self.embed = embed
        patch_dim = in_ch * patch * patch

        # Synthetic head configs: name -> (idx into head output, threshold).
        self.diagnosis_cfg = {"glaucoma": (2, 0.10), "amd": (5, 0.20), "dr": (0, 0.30)}
        self.referral_cfg = {"urgent": (1, 0.15), "routine": (3, 0.25)}
        n_diag, n_ref = len(self.diagnosis_cfg), len(self.referral_cfg)
        self.total_out = (n_diag + n_ref) * self.HEAD_OUT + len(self.PRIORITY_LEVELS)

        ks = jax.random.split(key, 6)
        s = 0.02
        # Raw synthetic parameters (f32, "checkpoint" stand-ins).
        self.pw = s * jax.random.normal(ks[0], (patch_dim, hidden), jnp.float32)
        self.pb = s * jax.random.normal(ks[1], (1, hidden), jnp.float32)
        self.projw = s * jax.random.normal(ks[2], (hidden, embed), jnp.float32)
        self.projb = s * jax.random.normal(ks[3], (1, embed), jnp.float32)
        self.hw = s * jax.random.normal(ks[4], (embed, self.total_out), jnp.float32)
        self.hb = s * jax.random.normal(ks[5], (1, self.total_out), jnp.float32)

        # Column offsets of each stacked head group (used by the reference check too).
        self.diag_off = {n: i * self.HEAD_OUT for i, n in enumerate(self.diagnosis_cfg)}
        ref_base = n_diag * self.HEAD_OUT
        self.ref_off = {n: ref_base + i * self.HEAD_OUT for i, n in enumerate(self.referral_cfg)}
        self.prio_off = ref_base + n_ref * self.HEAD_OUT

        # ---- constant-fold: patch embed + projection + selected head columns + thresholds ----
        sel_cols, thresh_list, self.sel_order = [], [], []
        for name, (idx, thresh) in self.diagnosis_cfg.items():
            sel_cols.append(self.diag_off[name] + idx)
            thresh_list.append(thresh)
            self.sel_order.append(("diagnosis", name))
        for name, (idx, thresh) in self.referral_cfg.items():
            sel_cols.append(self.ref_off[name] + idx)
            thresh_list.append(thresh)
            self.sel_order.append(("referral", name))
        for i, level in enumerate(self.PRIORITY_LEVELS):
            sel_cols.append(self.prio_off + i)
            thresh_list.append(0.0)
            self.sel_order.append(("priority", level))
        self.n_sel = len(sel_cols)

        hw_sel = self.hw[:, jnp.array(sel_cols)]                       # (embed, n_sel)
        hb_sel = self.hb[:, jnp.array(sel_cols)]                       # (1, n_sel)
        thresh_vec = jnp.array(thresh_list, jnp.float32)[None, :]      # (1, n_sel)

        # Post-pool linear chain collapsed: emb = pooled @ pw @ projw + (pb @ projw + projb)
        #                                   head = emb @ hw_sel + hb_sel - thresh
        wc = jnp.concatenate([self.projw, self.projw @ hw_sel], axis=1)             # (H, D+n_sel)
        bc = jnp.concatenate([self.projb, self.projb @ hw_sel + hb_sel - thresh_vec],
                             axis=1)                                                 # (1, D+n_sel)
        w_total = self.pw @ wc                                                       # (patch_dim, D+n_sel)
        b_total = self.pb @ wc + bc                                                  # (1, D+n_sel)

        # Lane-dense padding: [emb | heads | 0-pad] -> multiple of 128 (=> 256 total).
        self.out_w = embed + ((self.n_sel + self.LANE - 1) // self.LANE) * self.LANE
        pad = self.out_w - (embed + self.n_sel)
        self.w_bf16 = jnp.pad(w_total, ((0, 0), (0, pad))).astype(jnp.bfloat16)
        self.b_total = jnp.pad(b_total, ((0, 0), (0, pad))).astype(jnp.float32)

        self._forward = jax.jit(self._forward_impl)

    # ------------------------------------------------------------------
    def _forward_impl(self, x):
        B = x.shape[0]
        patches = nchw_to_patches(x, self.patch)                       # (B*P, patch_dim)
        P = patches.shape[0] // B
        # Mean-pool commutes with the linear patch embed -> pool BEFORE the matmul.
        pooled = patches.reshape(B, P, -1).mean(axis=1).astype(jnp.bfloat16)  # (B, patch_dim)

        combined = run_prima_kernel(pooled, self.w_bf16, self.b_total)
        emb = combined[:, : self.embed]
        heads = combined[:, self.embed: self.embed + self.n_sel]       # thresholds already applied

        ret = {"diagnosis": {}, "referral": {}, "priority": {}, "clip_emb": emb}
        for pos, (group, name) in enumerate(self.sel_order):
            ret[group][name] = heads[:, pos]
        return ret

    def __call__(self, x):
        return self._forward(x)


if __name__ == "__main__":
    key = jax.random.PRNGKey(0)
    k_param, k_x = jax.random.split(key)

    # Small shapes consistent with the forward: batch=2, channels=4, 16x16 image.
    x = jax.random.normal(k_x, (2, 4, 16, 16), jnp.float32)

    model = PrimaModelWHeadsPallas(k_param, in_ch=4, img=16, patch=8, hidden=128, embed=128)
    out = model(x)
    jax.block_until_ready(out)

    # Pure-JAX reference of the ORIGINAL (un-folded, f32) math.
    B = x.shape[0]
    patches = nchw_to_patches(x, model.patch)
    hidden = patches @ model.pw + model.pb                              # (B*P, H)
    pooled_h = hidden.reshape(B, -1, model.hidden).mean(axis=1)         # (B, H)
    emb_ref = pooled_h @ model.projw + model.projb                      # (B, D)
    logits_ref = emb_ref @ model.hw + model.hb                          # (B, total_out)

    atol = 5e-3  # bf16 weight/activation rounding vs the f32 reference
    assert jnp.allclose(out["clip_emb"], emb_ref, atol=atol)
    for name, (idx, thresh) in model.diagnosis_cfg.items():
        assert jnp.allclose(out["diagnosis"][name],
                            logits_ref[:, model.diag_off[name] + idx] - thresh, atol=atol)
    for name, (idx, thresh) in model.referral_cfg.items():
        assert jnp.allclose(out["referral"][name],
                            logits_ref[:, model.ref_off[name] + idx] - thresh, atol=atol)
    for i, level in enumerate(model.PRIORITY_LEVELS):
        assert jnp.allclose(out["priority"][level],
                            logits_ref[:, model.prio_off + i], atol=atol)

    print("KERNEL_OK")
</pallas_src>

<mosaic_0001>
module attributes {stable_mosaic.version = 11 : i64} {
  func.func @prima_kernel(%arg0: memref<2x256xbf16, #tpu.memory_space<vmem>>, %arg1: memref<256x256xbf16, #tpu.memory_space<vmem>>, %arg2: memref<1x256xf32, #tpu.memory_space<vmem>>, %arg3: memref<2x256xf32, #tpu.memory_space<vmem>>) attributes {dimension_semantics = [], scalar_prefetch = 0 : i64, scratch_operands = 0 : i64, tpu.core_type = #tpu.core_type<tc>} {
    %c0 = arith.constant 0 : index
    %c0_0 = arith.constant 0 : index
    %0 = vector.load %arg0[%c0, %c0_0] : memref<2x256xbf16, #tpu.memory_space<vmem>>, vector<2x256xbf16>
    %c0_1 = arith.constant 0 : index
    %c0_2 = arith.constant 0 : index
    %1 = vector.load %arg1[%c0_1, %c0_2] : memref<256x256xbf16, #tpu.memory_space<vmem>>, vector<256x256xbf16>
    %cst = arith.constant dense<0.000000e+00> : vector<2x256xf32>
    %2 = tpu.matmul %0, %1, %cst {dimension_numbers = #tpu.dot_dimension_numbers<[1], [0], [0], [1], [0, 0, 1, 1], [], []>} : vector<2x256xbf16>, vector<256x256xbf16>, vector<2x256xf32> -> vector<2x256xf32>
    %c0_3 = arith.constant 0 : index
    %c0_4 = arith.constant 0 : index
    %3 = vector.load %arg2[%c0_3, %c0_4] : memref<1x256xf32, #tpu.memory_space<vmem>>, vector<1x256xf32>
    %4 = vector.broadcast %3 : vector<1x256xf32> to vector<2x256xf32>
    %5 = arith.addf %2, %4 : vector<2x256xf32>
    %c0_5 = arith.constant 0 : index
    %c0_6 = arith.constant 0 : index
    %6 = vector.load %arg3[%c0_5, %c0_6] : memref<2x256xf32, #tpu.memory_space<vmem>>, vector<2x256xf32>
    tpu.vector_store %arg3[%c0_5, %c0_6], %5 {strides = array<i32>} : memref<2x256xf32, #tpu.memory_space<vmem>>, vector<2x256xf32>,
    return
  }
}

</mosaic_0001>

<llo_original>
// kernel: _forward_impl.1
$region0: #{_forward_impl.1}
  #allocation0 [shape = 'u32[]', space=smem, size = 0x4, offset = 0x4, fixed_abs, tag = 'smem constant byte address 0x4 - core index']
  #allocation1 [shape = 'u32[144,128]{1,0:T(1,128)}', space=vmem, size = 0x12000, scoped, tag = 'internal scratch']
  %s0 = inlined_call_operand.vmem [shape: bf16[2,256], index: 0, kind: input, shape index: {}]
  %s1 = inlined_call_operand.vmem [shape: bf16[256,256], index: 1, kind: input, shape index: {}]
  %s2 = inlined_call_operand.vmem [shape: f32[1,256], index: 2, kind: input, shape index: {}]
  %s3 = inlined_call_operand.vmem [shape: f32[2,256], index: 3, kind: output, shape index: {}]
  %s4 = sld [smem:[#allocation0]]
  $region22: #{_forward_impl.1} parent=0
    _
  %s6 = ssub.s32 1, %s4
  %s7 = scalar_select 0, %s6, %s4
  // Predicated region
  $region2: #{_forward_impl.1} parent=0 // pred_check
    _
  $region3: #{_forward_impl.1} parent=0 // pred_check_branch
    %9 = sbr.rel (0) target = $region5
  $region4: #{_forward_impl.1} parent=0 // pred_region
    _
  $region5: #{_forward_impl.1} parent=0 // pred_fallthru
    _
  // Predicated region
  $region6: #{_forward_impl.1} parent=0 // pred_check
    _
  $region7: #{_forward_impl.1} parent=0 // pred_check_branch
    %11 = sbr.rel (0) target = $region9
  $region8: #{_forward_impl.1} parent=0 // pred_region
    _
  $region9: #{_forward_impl.1} parent=0 // pred_fallthru
    _
  // Predicated region
  $region10: #{_forward_impl.1} parent=0 // pred_check
    _
  $region11: #{_forward_impl.1} parent=0 // pred_check_branch
    %13 = sbr.rel (0) target = $region13
  $region12: #{_forward_impl.1} parent=0 // pred_region
    _
  $region13: #{_forward_impl.1} parent=0 // pred_fallthru
    _
  %v14 = vld [vmem:[%s0] sm:$0x3]
  %v15 = vld [vmem:[%s1] sm:$0xff]
  %v16 = vld [vmem:[%s1 + $0x8] sm:$0xff]
  %v17 = vld [vmem:[%s1 + $0x10] sm:$0xff]
  %v18 = vld [vmem:[%s1 + $0x18] sm:$0xff]
  %v19 = vld [vmem:[%s1 + $0x20] sm:$0xff]
  %v20 = vld [vmem:[%s1 + $0x28] sm:$0xff]
  %v21 = vld [vmem:[%s1 + $0x30] sm:$0xff]
  %v22 = vld [vmem:[%s1 + $0x38] sm:$0xff]
  %v23 = vld [vmem:[%s1 + $0x40] sm:$0xff]
  %v24 = vld [vmem:[%s1 + $0x48] sm:$0xff]
  %v25 = vld [vmem:[%s1 + $0x50] sm:$0xff]
  %v26 = vld [vmem:[%s1 + $0x58] sm:$0xff]
  %v27 = vld [vmem:[%s1 + $0x60] sm:$0xff]
  %v28 = vld [vmem:[%s1 + $0x68] sm:$0xff]
  %v29 = vld [vmem:[%s1 + $0x70] sm:$0xff]
  %v30 = vld [vmem:[%s1 + $0x78] sm:$0xff]
  %v31 = vld [vmem:[%s1 + $0x80] sm:$0xff]
  %v32 = vld [vmem:[%s1 + $0x88] sm:$0xff]
  %v33 = vld [vmem:[%s1 + $0x90] sm:$0xff]
  %v34 = vld [vmem:[%s1 + $0x98] sm:$0xff]
  %v35 = vld [vmem:[%s1 + $0xa0] sm:$0xff]
  %v36 = vld [vmem:[%s1 + $0xa8] sm:$0xff]
  %v37 = vld [vmem:[%s1 + $0xb0] sm:$0xff]
  %v38 = vld [vmem:[%s1 + $0xb8] sm:$0xff]
  %v39 = vld [vmem:[%s1 + $0xc0] sm:$0xff]
  %v40 = vld [vmem:[%s1 + $0xc8] sm:$0xff]
  %v41 = vld [vmem:[%s1 + $0xd0] sm:$0xff]
  %v42 = vld [vmem:[%s1 + $0xd8] sm:$0xff]
  %v43 = vld [vmem:[%s1 + $0xe0] sm:$0xff]
  %v44 = vld [vmem:[%s1 + $0xe8] sm:$0xff]
  %v45 = vld [vmem:[%s1 + $0xf0] sm:$0xff]
  %v46 = vld [vmem:[%s1 + $0xf8] sm:$0xff]
  %v47 = vld [vmem:[%s2] sm:$0x3]
  %v49 = vlaneseq
  %v50 = vshrl.u32 %v49, 7
  %v51 = vsub.s32 0, %v50
  %v52 = vrot.slane %v47, %v51
  %v53 = vlaneseq
  %v54 = vshrl.u32 %v53, 7
  %v55 = vsub.s32 1, %v54
  %v56 = vrot.slane %v47, %v55
  %v61 = vunpack.c.l.s4 1966171168
  %v62 = vunpack.c.0.s8 %v61
  %v63 = vlaneseq
  %v64 = vshrl.u32 %v63, 7
  %v65 = vsub.s32 %v62, %v64
  %v66 = vrot.slane %v14, %v65
  %v67 = vcombine.high %v66, %v66
  %v69 = vunpack.c.l.s4 1966171168
  %v70 = vunpack.c.0.s8 %v69
  %v71 = vlaneseq
  %v72 = vshrl.u32 %v71, 7
  %v73 = vsub.s32 %v70, %v72
  %v74 = vrot.slane %v66, %v73
  %v76 = vunpack.c.l.s4 1966171168
  %v77 = vunpack.c.0.s8 %v76
  %v78 = vlaneseq
  %v79 = vshrl.u32 %v78, 7
  %v80 = vsub.s32 %v77, %v79
  %v81 = vrot.slane %v67, %v80
  %v116 = vunpack.c.l.b16 %v15
  %v117 = vunpack.c.h.b16 %v15
  %v118 = vunpack.c.l.b16 %v16
  %v119 = vunpack.c.h.b16 %v16
  %v120 = vunpack.c.l.b16 %v17
  %v121 = vunpack.c.h.b16 %v17
  %v122 = vunpack.c.l.b16 %v18
  %v123 = vunpack.c.h.b16 %v18
  %v124 = vunpack.c.l.b16 %v19
  %v125 = vunpack.c.h.b16 %v19
  %v126 = vunpack.c.l.b16 %v20
  %v127 = vunpack.c.h.b16 %v20
  %v128 = vunpack.c.l.b16 %v21
  %v129 = vunpack.c.h.b16 %v21
  %v130 = vunpack.c.l.b16 %v22
  %v131 = vunpack.c.h.b16 %v22
  %v132 = vunpack.c.l.b16 %v23
  %v133 = vunpack.c.h.b16 %v23
  %v134 = vunpack.c.l.b16 %v24
  %v135 = vunpack.c.h.b16 %v24
  %v136 = vunpack.c.l.b16 %v25
  %v137 = vunpack.c.h.b16 %v25
  %v138 = vunpack.c.l.b16 %v26
  %v139 = vunpack.c.h.b16 %v26
  %v140 = vunpack.c.l.b16 %v27
  %v141 = vunpack.c.h.b16 %v27
  %v142 = vunpack.c.l.b16 %v28
  %v143 = vunpack.c.h.b16 %v28
  %v144 = vunpack.c.l.b16 %v29
  %v145 = vunpack.c.h.b16 %v29
  %v146 = vunpack.c.l.b16 %v30
  %v147 = vunpack.c.h.b16 %v30
  %v148 = vunpack.c.l.b16 %v31
  %v149 = vunpack.c.h.b16 %v31
  %v150 = vunpack.c.l.b16 %v32
  %v151 = vunpack.c.h.b16 %v32
  %v152 = vunpack.c.l.b16 %v33
  %v153 = vunpack.c.h.b16 %v33
  %v154 = vunpack.c.l.b16 %v34
  %v155 = vunpack.c.h.b16 %v34
  %v156 = vunpack.c.l.b16 %v35
  %v157 = vunpack.c.h.b16 %v35
  %v158 = vunpack.c.l.b16 %v36
  %v159 = vunpack.c.h.b16 %v36
  %v160 = vunpack.c.l.b16 %v37
  %v161 = vunpack.c.h.b16 %v37
  %v162 = vunpack.c.l.b16 %v38
  %v163 = vunpack.c.h.b16 %v38
  %v164 = vunpack.c.l.b16 %v39
  %v165 = vunpack.c.h.b16 %v39
  %v166 = vunpack.c.l.b16 %v40
  %v167 = vunpack.c.h.b16 %v40
  %v168 = vunpack.c.l.b16 %v41
  %v169 = vunpack.c.h.b16 %v41
  %v170 = vunpack.c.l.b16 %v42
  %v171 = vunpack.c.h.b16 %v42
  %v172 = vunpack.c.l.b16 %v43
  %v173 = vunpack.c.h.b16 %v43
  %v174 = vunpack.c.l.b16 %v44
  %v175 = vunpack.c.h.b16 %v44
  %v176 = vunpack.c.l.b16 %v45
  %v177 = vunpack.c.h.b16 %v45
  %v178 = vunpack.c.l.b16 %v46
  %v179 = vunpack.c.h.b16 %v46
  %v180 = vpack.c.b16 %v118, %v116
  %v181 = vpack.c.b16 %v119, %v117
  %v182 = vpack.c.b16 %v122, %v120
  %v183 = vpack.c.b16 %v123, %v121
  %v184 = vpack.c.b16 %v126, %v124
  %v185 = vpack.c.b16 %v127, %v125
  %v186 = vpack.c.b16 %v130, %v128
  %v187 = vpack.c.b16 %v131, %v129
  %v188 = vpack.c.b16 %v134, %v132
  %v189 = vpack.c.b16 %v135, %v133
  %v190 = vpack.c.b16 %v138, %v136
  %v191 = vpack.c.b16 %v139, %v137
  %v192 = vpack.c.b16 %v142, %v140
  %v193 = vpack.c.b16 %v143, %v141
  %v194 = vpack.c.b16 %v146, %v144
  %v195 = vpack.c.b16 %v147, %v145
  %v196 = vpack.c.b16 %v150, %v148
  %v197 = vpack.c.b16 %v151, %v149
  %v198 = vpack.c.b16 %v154, %v152
  %v199 = vpack.c.b16 %v155, %v153
  %v200 = vpack.c.b16 %v158, %v156
  %v201 = vpack.c.b16 %v159, %v157
  %v202 = vpack.c.b16 %v162, %v160
  %v203 = vpack.c.b16 %v163, %v161
  %v204 = vpack.c.b16 %v166, %v164
  %v205 = vpack.c.b16 %v167, %v165
  %v206 = vpack.c.b16 %v170, %v168
  %v207 = vpack.c.b16 %v171, %v169
  %v208 = vpack.c.b16 %v174, %v172
  %v209 = vpack.c.b16 %v175, %v173
  %v210 = vpack.c.b16 %v178, %v176
  %v211 = vpack.c.b16 %v179, %v177
  %244 = vmatprep.subr.bf16.mxu0 %v181
  %245 = vmatpush1.bf16.msra.mxu0 %v180
  %246 = vmatprep.subr.bf16.mxu0 %v183
  %247 = vmatpush1.bf16.msra.mxu0 %v182
  %248 = vmatprep.subr.bf16.mxu0 %v185
  %249 = vmatpush1.bf16.msra.mxu0 %v184
  %250 = vmatprep.subr.bf16.mxu0 %v187
  %251 = vmatpush1.bf16.msra.mxu0 %v186
  %252 = vmatprep.subr.bf16.mxu0 %v189
  %253 = vmatpush1.bf16.msra.mxu0 %v188
  %254 = vmatprep.subr.bf16.mxu0 %v191
  %255 = vmatpush1.bf16.msra.mxu0 %v190
  %256 = vmatprep.subr.bf16.mxu0 %v193
  %257 = vmatpush1.bf16.msra.mxu0 %v192
  %258 = vmatprep.subr.bf16.mxu0 %v195
  %259 = vmatpush1.bf16.msra.mxu0 %v194
  %260 = vmatprep.subr.bf16.mxu0 %v197
  %261 = vmatpush1.bf16.msra.mxu0 %v196
  %262 = vmatprep.subr.bf16.mxu0 %v199
  %263 = vmatpush1.bf16.msra.mxu0 %v198
  %264 = vmatprep.subr.bf16.mxu0 %v201
  %265 = vmatpush1.bf16.msra.mxu0 %v200
  %266 = vmatprep.subr.bf16.mxu0 %v203
  %267 = vmatpush1.bf16.msra.mxu0 %v202
  %268 = vmatprep.subr.bf16.mxu0 %v205
  %269 = vmatpush1.bf16.msra.mxu0 %v204
  %270 = vmatprep.subr.bf16.mxu0 %v207
  %271 = vmatpush1.bf16.msra.mxu0 %v206
  %272 = vmatprep.subr.bf16.mxu0 %v209
  %273 = vmatpush1.bf16.msra.mxu0 %v208
  %274 = vmatprep.subr.bf16.mxu0 %v211
  %275 = vmatpush1.bf16.msra.mxu0 %v210
  %276 = vmatprep.mubr.bf16.mxu0 %v81
  %277 = vmatmul.mubr.bf16.gmra.mrb[0].mxu0 %v74
  %v278 = vpop.f32.mrb[0].mxu0
  %v279 = vadd.f32 %v52, %v278
  %v280 = vpop.f32.mrb[0].mxu0
  %v281 = vadd.f32 %v56, %v280
  %v282 = vpop.f32.mrb[0].mxu0
  %v283 = vpop.f32.mrb[0].mxu0
  %284 = vdwg.mxu0
  %v287 = vcombine.low %v279, %v281
  %v289 = vunpack.c.l.s4 1983009808
  %v290 = vunpack.c.0.s8 %v289
  %v291 = vlaneseq
  %v292 = vshrl.u32 %v291, 7
  %v293 = vsub.s32 %v290, %v292
  %v294 = vrot.slane %v287, %v293
  %296 = vst [vmem:[%s3] sm:$0xf] %v294
  // Predicated region
  $region14: #{_forward_impl.1} parent=0 // pred_check
    _
  $region15: #{_forward_impl.1} parent=0 // pred_check_branch
    %298 = sbr.rel (0) target = $region17
  $region16: #{_forward_impl.1} parent=0 // pred_region
    _
  $region17: #{_forward_impl.1} parent=0 // pred_fallthru
    _
  // Predicated region
  $region18: #{_forward_impl.1} parent=0 // pred_check
    _
  $region19: #{_forward_impl.1} parent=0 // pred_check_branch
    %300 = sbr.rel (0) target = $region21
  $region20: #{_forward_impl.1} parent=0 // pred_region
    _
  $region21: #{_forward_impl.1} parent=0 // pred_fallthru
    _

</llo_original>
